<compile_context>
chip_gen: v5e
topology: v5e:2x2
jax: 0.10.0
libtpu: 0.0.40
codegen_flags: <defaults>
</compile_context>

<pallas_src>
import jax
import jax.numpy as jnp
from jax import lax
from jax.experimental import pallas as pl
from jax.experimental.pallas import tpu as pltpu


_MAX_UNROLL_T = 32  # beyond this, switch the recurrence to lax.fori_loop


def _reward_kernel(x_ref,        # [T*B, D_in]  bf16, time-major rows (row = t*B + b)
                   wfused_ref,   # [D_in, 4H]   bf16, wf @ wih (PyTorch gate order i,f,g,o)
                   bfused_ref,   # [1, 4H]      f32,  bf @ wih + b_ih + b_hh
                   whhpad_ref,   # [4H, 4H]     bf16, rows [0:H) = W_hh^T, rows [H:4H) = 0
                   woutpad_ref,  # [1, 4H]      f32,  lanes [0:H) = cnn_output.weight, rest 0
                   bout_ref,     # [1, 1]       f32
                   o_ref):       # [B, 1]       f32 sigmoid score
    B = o_ref.shape[0]
    H4 = whhpad_ref.shape[0]          # 4H == lane width of the gate vreg
    H = H4 // 4
    T = x_ref.shape[0] // B

    # ---- Hoisted input projection: one bf16 MXU matmul + a single f32 bias add.
    gx = (jnp.dot(x_ref[...], wfused_ref[...],
                  preferred_element_type=jnp.float32)
          + bfused_ref[...])                                     # [T*B, 4H] f32

    whh_pad = whhpad_ref[...]                                    # hoisted bf16 read

    # h / c carried lane-padded to the full 4H gate width: the loop body is pure
    # full-vreg work (no sub-vreg lane extraction on the serial critical path);
    # lanes [H:4H) are garbage but only ever multiply zero weight rows / lanes.
    h = jnp.zeros((B, H4), jnp.float32)
    c = jnp.zeros((B, H4), jnp.float32)

    # TODO(synk): keep whh_pad weight-stationary in the MXU across the unrolled
    # steps via pltpu.matmul_push_rhs / matmul_acc_lhs / matmul_pop if the
    # Mosaic dump shows the compiler re-pushing the RHS every step.
    def lstm_step(gx_t, h, c):
        # Recurrent matmul on the serial critical path: bf16 operands, f32 acc.
        gates = gx_t + jnp.dot(h.astype(jnp.bfloat16), whh_pad,
                               preferred_element_type=jnp.float32)   # [B,4H] f32
        # Full-vreg EUP activations (same vreg-op count as the partial slices)...
        sig = jax.nn.sigmoid(gates)       # lanes [i | f | . | o] valid
        tnh = jnp.tanh(gates)             # lanes [. | . | g | .] valid
        # ...then XLU lane rolls align f / g / o onto lanes [0:H) (np.roll
        # semantics: result[j] = x[(j - shift) mod 4H]).
        f_al = pltpu.roll(sig, shift=3 * H, axis=1)   # lane j <- lane j +  H  (f)
        g_al = pltpu.roll(tnh, shift=2 * H, axis=1)   # lane j <- lane j + 2H  (g)
        o_al = pltpu.roll(sig, shift=1 * H, axis=1)   # lane j <- lane j + 3H  (o)
        # All elementwise updates in f32 (v5e has no bf16 VPU/EUP).
        c_new = f_al * c + sig * g_al                 # sig lanes [0:H) == i
        h_new = o_al * jnp.tanh(c_new)
        return h_new, c_new

    if T <= _MAX_UNROLL_T:
        # Short static trip count: full unroll so the LLO scheduler interleaves
        # MXU / EUP / XLU work of adjacent steps.
        for t in range(T):
            h, c = lstm_step(gx[t * B:(t + 1) * B, :], h, c)
    else:
        # Guard for large T: bound live ranges instead of spilling the 64-vreg
        # file with a fully unrolled body.
        def body(t, carry):
            h_c, c_c = carry
            start = pl.multiple_of(t * B, B)
            gx_t = lax.dynamic_slice_in_dim(gx, start, B, axis=0)
            return lstm_step(gx_t, h_c, c_c)
        h, c = lax.fori_loop(0, T, body, (h, c), unroll=8)

    # Output head: Linear(H -> 1) + sigmoid; the zero-padded weight masks the
    # garbage lanes [H:4H) of h.
    logit = (jnp.sum(h * woutpad_ref[...], axis=-1, keepdims=True)
             + bout_ref[...])
    o_ref[...] = jax.nn.sigmoid(logit)


def prepare_fused_params(params):
    """One-time parameter fusion, hoisted OUT of the per-call jitted forward.

    W_fused  = wf @ wih            [D_in, 4H]  bf16 (MXU operand)
    b_fused  = bf @ wih + b_lstm   [1, 4H]     f32  (added post-matmul)
    whh_pad  = [W_hh^T ; 0]        [4H, 4H]    bf16 (MXU operand)
    wout_pad = [wout, 0]           [1, 4H]     f32
    PyTorch gate order (i, f, g, o) is kept: the kernel aligns gates with lane
    rolls instead of lane slices, so no column reorder is needed.
    """
    H = params["whh"].shape[0]
    w_fused = (params["wf"] @ params["wih"]).astype(jnp.bfloat16)
    b_fused = params["bf"] @ params["wih"] + params["b_lstm"]
    whh_pad = jnp.zeros((4 * H, 4 * H), jnp.float32).at[:H].set(params["whh"])
    whh_pad = whh_pad.astype(jnp.bfloat16)
    wout_pad = jnp.zeros((1, 4 * H), jnp.float32).at[:, :H].set(params["wout"])
    return {"w_fused": w_fused, "b_fused": b_fused, "whh_pad": whh_pad,
            "wout_pad": wout_pad, "bout": params["bout"]}


@jax.jit
def reward_max_margin_forward(x_btd, fused):
    """x_btd: [B, T, D_in] float32 (PyTorch batch-first layout).
    fused: output of prepare_fused_params (computed once at load time).
    Returns score of shape [1, B, 1] (== sigmoid(cnn_output(last_hidden)))."""
    B, T, D_in = x_btd.shape
    H4 = fused["whh_pad"].shape[0]

    # Time-major flattened rows (row = t*B + b): each timestep's gate block is a
    # contiguous (8,128)-aligned row slab; cast to bf16 for the MXU.
    x_flat = (jnp.transpose(x_btd, (1, 0, 2))
              .reshape(T * B, D_in).astype(jnp.bfloat16))

    cost = pl.CostEstimate(
        flops=2 * T * B * (D_in + H4) * H4,
        transcendentals=3 * T * B * H4 + B,
        bytes_accessed=(x_flat.size * 2 + fused["w_fused"].size * 2
                        + fused["whh_pad"].size * 2 + fused["b_fused"].size * 4
                        + fused["wout_pad"].size * 4 + 4 + B * 4),
    )

    vmem = pl.BlockSpec(memory_space=pltpu.MemorySpace.VMEM)
    score = pl.pallas_call(
        _reward_kernel,
        out_shape=jax.ShapeDtypeStruct((B, 1), jnp.float32),
        in_specs=[vmem] * 6,
        out_specs=vmem,
        cost_estimate=cost,
        # Resident footprint today is <100 KB; do not raise this for larger
        # shapes without re-deriving against v7x's 64 MiB physical VMEM.
        compiler_params=pltpu.CompilerParams(vmem_limit_bytes=32 * 1024 * 1024),
    )(x_flat, fused["w_fused"], fused["b_fused"], fused["whh_pad"],
      fused["wout_pad"], fused["bout"])

    # TODO(synk): if T*B scales up (v7x, 64 MiB VMEM), split the gx matmul out
    # and run the recurrence as grid=(T,) with a (1, B, 4H) BlockSpec and h/c in
    # VMEM scratch; if B scales up, add a batch-parallel grid axis
    # (dimension_semantics=("parallel",)) to use both v7x TensorCores.
    return score.reshape(1, B, 1)


def _uniform(key, shape, bound):
    return jax.random.uniform(key, shape, jnp.float32, -bound, bound)


def init_params(key, input_size, output_size):
    """Deterministic synthetic parameters mirroring the nn.Module shapes.
    Everything is pre-transposed to right-multiply form; LSTM gate order is
    PyTorch's native (i, f, g, o)."""
    H = output_size
    ks = jax.random.split(key, 8)
    inv_in = 1.0 / (input_size ** 0.5)
    inv_h = 1.0 / (H ** 0.5)

    wf = _uniform(ks[0], (input_size, H), inv_in)          # cnn_feature_encoded.weight.T
    bf = _uniform(ks[1], (1, H), inv_in)                   # cnn_feature_encoded.bias
    wih = _uniform(ks[2], (H, 4 * H), inv_h)               # encoder.weight_ih_l0.T
    whh = _uniform(ks[3], (H, 4 * H), inv_h)               # encoder.weight_hh_l0.T
    b_ih = _uniform(ks[4], (1, 4 * H), inv_h)
    b_hh = _uniform(ks[5], (1, 4 * H), inv_h)
    wout = _uniform(ks[6], (1, H), inv_h)                  # cnn_output.weight
    bout = _uniform(ks[7], (1, 1), inv_h)                  # cnn_output.bias

    return {"wf": wf, "bf": bf, "wih": wih, "whh": whh,
            "b_lstm": b_ih + b_hh, "wout": wout, "bout": bout}


def reference_forward(x_btd, params):
    """Pure-JAX f32 reference of the PyTorch forward (unfused, i/f/g/o order)."""
    H = params["wf"].shape[1]
    enc = x_btd @ params["wf"] + params["bf"]              # [B, T, H]
    B, T, _ = enc.shape
    h = jnp.zeros((B, H), jnp.float32)
    c = jnp.zeros((B, H), jnp.float32)
    for t in range(T):
        gates = enc[:, t, :] @ params["wih"] + h @ params["whh"] + params["b_lstm"]
        i_g = jax.nn.sigmoid(gates[:, 0 * H:1 * H])
        f_g = jax.nn.sigmoid(gates[:, 1 * H:2 * H])
        g_g = jnp.tanh(gates[:, 2 * H:3 * H])
        o_g = jax.nn.sigmoid(gates[:, 3 * H:4 * H])
        c = f_g * c + i_g * g_g
        h = o_g * jnp.tanh(c)
    logit = jnp.sum(h * params["wout"], axis=-1, keepdims=True) + params["bout"]
    return jax.nn.sigmoid(logit).reshape(1, B, 1)


if __name__ == "__main__":
    B, T, INPUT_SIZE, OUTPUT_SIZE = 8, 8, 32, 32

    key = jax.random.PRNGKey(0)
    k_x, k_p = jax.random.split(key)
    x = jax.random.normal(k_x, (B, T, INPUT_SIZE), jnp.float32)
    params = init_params(k_p, INPUT_SIZE, OUTPUT_SIZE)

    # One-time parameter fusion (hoisted out of the per-forward jitted path).
    fused = prepare_fused_params(params)

    score = reward_max_margin_forward(x, fused)
    score = jax.block_until_ready(score)

    ref = reference_forward(x, params)
    assert score.shape == (1, B, 1), score.shape
    # bf16 MXU operands (hoisted gx matmul + the per-step h@Whh recurrence) vs.
    # the f32 reference: tolerance loosened accordingly.
    assert jnp.allclose(score, ref, atol=2e-2, rtol=2e-2), (score, ref)

    print("KERNEL_OK")
</pallas_src>

<mosaic_0001>
module attributes {stable_mosaic.version = 11 : i64} {
  func.func @_reward_kernel(%arg0: memref<64x32xbf16, #tpu.memory_space<vmem>>, %arg1: memref<32x128xbf16, #tpu.memory_space<vmem>>, %arg2: memref<1x128xf32, #tpu.memory_space<vmem>>, %arg3: memref<128x128xbf16, #tpu.memory_space<vmem>>, %arg4: memref<1x128xf32, #tpu.memory_space<vmem>>, %arg5: memref<1x1xf32, #tpu.memory_space<vmem>>, %arg6: memref<8x1xf32, #tpu.memory_space<vmem>>) attributes {dimension_semantics = [], scalar_prefetch = 0 : i64, scratch_operands = 0 : i64, tpu.core_type = #tpu.core_type<tc>} {
    %c0 = arith.constant 0 : index
    %c0_0 = arith.constant 0 : index
    %0 = vector.load %arg0[%c0, %c0_0] : memref<64x32xbf16, #tpu.memory_space<vmem>>, vector<64x32xbf16>
    %c0_1 = arith.constant 0 : index
    %c0_2 = arith.constant 0 : index
    %1 = vector.load %arg1[%c0_1, %c0_2] : memref<32x128xbf16, #tpu.memory_space<vmem>>, vector<32x128xbf16>
    %cst = arith.constant dense<0.000000e+00> : vector<64x128xf32>
    %2 = tpu.matmul %0, %1, %cst {dimension_numbers = #tpu.dot_dimension_numbers<[1], [0], [0], [1], [0, 0, 1, 1], [], []>} : vector<64x32xbf16>, vector<32x128xbf16>, vector<64x128xf32> -> vector<64x128xf32>
    %c0_3 = arith.constant 0 : index
    %c0_4 = arith.constant 0 : index
    %3 = vector.load %arg2[%c0_3, %c0_4] : memref<1x128xf32, #tpu.memory_space<vmem>>, vector<1x128xf32>
    %4 = vector.broadcast %3 : vector<1x128xf32> to vector<64x128xf32>
    %5 = arith.addf %2, %4 : vector<64x128xf32>
    %c0_5 = arith.constant 0 : index
    %c0_6 = arith.constant 0 : index
    %6 = vector.load %arg3[%c0_5, %c0_6] : memref<128x128xbf16, #tpu.memory_space<vmem>>, vector<128x128xbf16>
    %cst_7 = arith.constant 0.000000e+00 : f32
    %7 = vector.broadcast %cst_7 : f32 to vector<8x128xf32>
    %cst_8 = arith.constant 0.000000e+00 : f32
    %8 = vector.broadcast %cst_8 : f32 to vector<8x128xf32>
    %9 = vector.extract_strided_slice %5 {offsets = [0, 0], sizes = [8, 128], strides = [1, 1]} : vector<64x128xf32> to vector<8x128xf32>
    %10 = arith.truncf %7 : vector<8x128xf32> to vector<8x128xbf16>
    %cst_9 = arith.constant dense<0.000000e+00> : vector<8x128xf32>
    %11 = tpu.matmul %10, %6, %cst_9 {dimension_numbers = #tpu.dot_dimension_numbers<[1], [0], [0], [1], [0, 0, 1, 1], [], []>} : vector<8x128xbf16>, vector<128x128xbf16>, vector<8x128xf32> -> vector<8x128xf32>
    %12 = arith.addf %9, %11 : vector<8x128xf32>
    %13 = arith.negf %12 : vector<8x128xf32>
    %14 = math.exp %13 : vector<8x128xf32>
    %cst_10 = arith.constant 1.000000e+00 : f32
    %15 = vector.broadcast %cst_10 : f32 to vector<8x128xf32>
    %16 = arith.addf %15, %14 : vector<8x128xf32>
    %17 = arith.divf %15, %16 : vector<8x128xf32>
    %18 = math.tanh %12 : vector<8x128xf32>
    %c96_i32 = arith.constant 96 : i32
    %19 = tpu.dynamic_rotate %17 by %c96_i32 dim 1 : vector<8x128xf32>, i32 -> vector<8x128xf32>
    %c64_i32 = arith.constant 64 : i32
    %20 = tpu.dynamic_rotate %18 by %c64_i32 dim 1 : vector<8x128xf32>, i32 -> vector<8x128xf32>
    %c32_i32 = arith.constant 32 : i32
    %21 = tpu.dynamic_rotate %17 by %c32_i32 dim 1 : vector<8x128xf32>, i32 -> vector<8x128xf32>
    %22 = arith.mulf %19, %8 : vector<8x128xf32>
    %23 = arith.mulf %17, %20 : vector<8x128xf32>
    %24 = arith.addf %22, %23 : vector<8x128xf32>
    %25 = math.tanh %24 : vector<8x128xf32>
    %26 = arith.mulf %21, %25 : vector<8x128xf32>
    %27 = vector.extract_strided_slice %5 {offsets = [8, 0], sizes = [8, 128], strides = [1, 1]} : vector<64x128xf32> to vector<8x128xf32>
    %28 = arith.truncf %26 : vector<8x128xf32> to vector<8x128xbf16>
    %cst_11 = arith.constant dense<0.000000e+00> : vector<8x128xf32>
    %29 = tpu.matmul %28, %6, %cst_11 {dimension_numbers = #tpu.dot_dimension_numbers<[1], [0], [0], [1], [0, 0, 1, 1], [], []>} : vector<8x128xbf16>, vector<128x128xbf16>, vector<8x128xf32> -> vector<8x128xf32>
    %30 = arith.addf %27, %29 : vector<8x128xf32>
    %31 = arith.negf %30 : vector<8x128xf32>
    %32 = math.exp %31 : vector<8x128xf32>
    %cst_12 = arith.constant 1.000000e+00 : f32
    %33 = vector.broadcast %cst_12 : f32 to vector<8x128xf32>
    %34 = arith.addf %33, %32 : vector<8x128xf32>
    %35 = arith.divf %33, %34 : vector<8x128xf32>
    %36 = math.tanh %30 : vector<8x128xf32>
    %c96_i32_13 = arith.constant 96 : i32
    %37 = tpu.dynamic_rotate %35 by %c96_i32_13 dim 1 : vector<8x128xf32>, i32 -> vector<8x128xf32>
    %c64_i32_14 = arith.constant 64 : i32
    %38 = tpu.dynamic_rotate %36 by %c64_i32_14 dim 1 : vector<8x128xf32>, i32 -> vector<8x128xf32>
    %c32_i32_15 = arith.constant 32 : i32
    %39 = tpu.dynamic_rotate %35 by %c32_i32_15 dim 1 : vector<8x128xf32>, i32 -> vector<8x128xf32>
    %40 = arith.mulf %37, %24 : vector<8x128xf32>
    %41 = arith.mulf %35, %38 : vector<8x128xf32>
    %42 = arith.addf %40, %41 : vector<8x128xf32>
    %43 = math.tanh %42 : vector<8x128xf32>
    %44 = arith.mulf %39, %43 : vector<8x128xf32>
    %45 = vector.extract_strided_slice %5 {offsets = [16, 0], sizes = [8, 128], strides = [1, 1]} : vector<64x128xf32> to vector<8x128xf32>
    %46 = arith.truncf %44 : vector<8x128xf32> to vector<8x128xbf16>
    %cst_16 = arith.constant dense<0.000000e+00> : vector<8x128xf32>
    %47 = tpu.matmul %46, %6, %cst_16 {dimension_numbers = #tpu.dot_dimension_numbers<[1], [0], [0], [1], [0, 0, 1, 1], [], []>} : vector<8x128xbf16>, vector<128x128xbf16>, vector<8x128xf32> -> vector<8x128xf32>
    %48 = arith.addf %45, %47 : vector<8x128xf32>
    %49 = arith.negf %48 : vector<8x128xf32>
    %50 = math.exp %49 : vector<8x128xf32>
    %cst_17 = arith.constant 1.000000e+00 : f32
    %51 = vector.broadcast %cst_17 : f32 to vector<8x128xf32>
    %52 = arith.addf %51, %50 : vector<8x128xf32>
    %53 = arith.divf %51, %52 : vector<8x128xf32>
    %54 = math.tanh %48 : vector<8x128xf32>
    %c96_i32_18 = arith.constant 96 : i32
    %55 = tpu.dynamic_rotate %53 by %c96_i32_18 dim 1 : vector<8x128xf32>, i32 -> vector<8x128xf32>
    %c64_i32_19 = arith.constant 64 : i32
    %56 = tpu.dynamic_rotate %54 by %c64_i32_19 dim 1 : vector<8x128xf32>, i32 -> vector<8x128xf32>
    %c32_i32_20 = arith.constant 32 : i32
    %57 = tpu.dynamic_rotate %53 by %c32_i32_20 dim 1 : vector<8x128xf32>, i32 -> vector<8x128xf32>
    %58 = arith.mulf %55, %42 : vector<8x128xf32>
    %59 = arith.mulf %53, %56 : vector<8x128xf32>
    %60 = arith.addf %58, %59 : vector<8x128xf32>
    %61 = math.tanh %60 : vector<8x128xf32>
    %62 = arith.mulf %57, %61 : vector<8x128xf32>
    %63 = vector.extract_strided_slice %5 {offsets = [24, 0], sizes = [8, 128], strides = [1, 1]} : vector<64x128xf32> to vector<8x128xf32>
    %64 = arith.truncf %62 : vector<8x128xf32> to vector<8x128xbf16>
    %cst_21 = arith.constant dense<0.000000e+00> : vector<8x128xf32>
    %65 = tpu.matmul %64, %6, %cst_21 {dimension_numbers = #tpu.dot_dimension_numbers<[1], [0], [0], [1], [0, 0, 1, 1], [], []>} : vector<8x128xbf16>, vector<128x128xbf16>, vector<8x128xf32> -> vector<8x128xf32>
    %66 = arith.addf %63, %65 : vector<8x128xf32>
    %67 = arith.negf %66 : vector<8x128xf32>
    %68 = math.exp %67 : vector<8x128xf32>
    %cst_22 = arith.constant 1.000000e+00 : f32
    %69 = vector.broadcast %cst_22 : f32 to vector<8x128xf32>
    %70 = arith.addf %69, %68 : vector<8x128xf32>
    %71 = arith.divf %69, %70 : vector<8x128xf32>
    %72 = math.tanh %66 : vector<8x128xf32>
    %c96_i32_23 = arith.constant 96 : i32
    %73 = tpu.dynamic_rotate %71 by %c96_i32_23 dim 1 : vector<8x128xf32>, i32 -> vector<8x128xf32>
    %c64_i32_24 = arith.constant 64 : i32
    %74 = tpu.dynamic_rotate %72 by %c64_i32_24 dim 1 : vector<8x128xf32>, i32 -> vector<8x128xf32>
    %c32_i32_25 = arith.constant 32 : i32
    %75 = tpu.dynamic_rotate %71 by %c32_i32_25 dim 1 : vector<8x128xf32>, i32 -> vector<8x128xf32>
    %76 = arith.mulf %73, %60 : vector<8x128xf32>
    %77 = arith.mulf %71, %74 : vector<8x128xf32>
    %78 = arith.addf %76, %77 : vector<8x128xf32>
    %79 = math.tanh %78 : vector<8x128xf32>
    %80 = arith.mulf %75, %79 : vector<8x128xf32>
    %81 = vector.extract_strided_slice %5 {offsets = [32, 0], sizes = [8, 128], strides = [1, 1]} : vector<64x128xf32> to vector<8x128xf32>
    %82 = arith.truncf %80 : vector<8x128xf32> to vector<8x128xbf16>
    %cst_26 = arith.constant dense<0.000000e+00> : vector<8x128xf32>
    %83 = tpu.matmul %82, %6, %cst_26 {dimension_numbers = #tpu.dot_dimension_numbers<[1], [0], [0], [1], [0, 0, 1, 1], [], []>} : vector<8x128xbf16>, vector<128x128xbf16>, vector<8x128xf32> -> vector<8x128xf32>
    %84 = arith.addf %81, %83 : vector<8x128xf32>
    %85 = arith.negf %84 : vector<8x128xf32>
    %86 = math.exp %85 : vector<8x128xf32>
    %cst_27 = arith.constant 1.000000e+00 : f32
    %87 = vector.broadcast %cst_27 : f32 to vector<8x128xf32>
    %88 = arith.addf %87, %86 : vector<8x128xf32>
    %89 = arith.divf %87, %88 : vector<8x128xf32>
    %90 = math.tanh %84 : vector<8x128xf32>
    %c96_i32_28 = arith.constant 96 : i32
    %91 = tpu.dynamic_rotate %89 by %c96_i32_28 dim 1 : vector<8x128xf32>, i32 -> vector<8x128xf32>
    %c64_i32_29 = arith.constant 64 : i32
    %92 = tpu.dynamic_rotate %90 by %c64_i32_29 dim 1 : vector<8x128xf32>, i32 -> vector<8x128xf32>
    %c32_i32_30 = arith.constant 32 : i32
    %93 = tpu.dynamic_rotate %89 by %c32_i32_30 dim 1 : vector<8x128xf32>, i32 -> vector<8x128xf32>
    %94 = arith.mulf %91, %78 : vector<8x128xf32>
    %95 = arith.mulf %89, %92 : vector<8x128xf32>
    %96 = arith.addf %94, %95 : vector<8x128xf32>
    %97 = math.tanh %96 : vector<8x128xf32>
    %98 = arith.mulf %93, %97 : vector<8x128xf32>
    %99 = vector.extract_strided_slice %5 {offsets = [40, 0], sizes = [8, 128], strides = [1, 1]} : vector<64x128xf32> to vector<8x128xf32>
    %100 = arith.truncf %98 : vector<8x128xf32> to vector<8x128xbf16>
    %cst_31 = arith.constant dense<0.000000e+00> : vector<8x128xf32>
    %101 = tpu.matmul %100, %6, %cst_31 {dimension_numbers = #tpu.dot_dimension_numbers<[1], [0], [0], [1], [0, 0, 1, 1], [], []>} : vector<8x128xbf16>, vector<128x128xbf16>, vector<8x128xf32> -> vector<8x128xf32>
    %102 = arith.addf %99, %101 : vector<8x128xf32>
    %103 = arith.negf %102 : vector<8x128xf32>
    %104 = math.exp %103 : vector<8x128xf32>
    %cst_32 = arith.constant 1.000000e+00 : f32
    %105 = vector.broadcast %cst_32 : f32 to vector<8x128xf32>
    %106 = arith.addf %105, %104 : vector<8x128xf32>
    %107 = arith.divf %105, %106 : vector<8x128xf32>
    %108 = math.tanh %102 : vector<8x128xf32>
    %c96_i32_33 = arith.constant 96 : i32
    %109 = tpu.dynamic_rotate %107 by %c96_i32_33 dim 1 : vector<8x128xf32>, i32 -> vector<8x128xf32>
    %c64_i32_34 = arith.constant 64 : i32
    %110 = tpu.dynamic_rotate %108 by %c64_i32_34 dim 1 : vector<8x128xf32>, i32 -> vector<8x128xf32>
    %c32_i32_35 = arith.constant 32 : i32
    %111 = tpu.dynamic_rotate %107 by %c32_i32_35 dim 1 : vector<8x128xf32>, i32 -> vector<8x128xf32>
    %112 = arith.mulf %109, %96 : vector<8x128xf32>
    %113 = arith.mulf %107, %110 : vector<8x128xf32>
    %114 = arith.addf %112, %113 : vector<8x128xf32>
    %115 = math.tanh %114 : vector<8x128xf32>
    %116 = arith.mulf %111, %115 : vector<8x128xf32>
    %117 = vector.extract_strided_slice %5 {offsets = [48, 0], sizes = [8, 128], strides = [1, 1]} : vector<64x128xf32> to vector<8x128xf32>
    %118 = arith.truncf %116 : vector<8x128xf32> to vector<8x128xbf16>
    %cst_36 = arith.constant dense<0.000000e+00> : vector<8x128xf32>
    %119 = tpu.matmul %118, %6, %cst_36 {dimension_numbers = #tpu.dot_dimension_numbers<[1], [0], [0], [1], [0, 0, 1, 1], [], []>} : vector<8x128xbf16>, vector<128x128xbf16>, vector<8x128xf32> -> vector<8x128xf32>
    %120 = arith.addf %117, %119 : vector<8x128xf32>
    %121 = arith.negf %120 : vector<8x128xf32>
    %122 = math.exp %121 : vector<8x128xf32>
    %cst_37 = arith.constant 1.000000e+00 : f32
    %123 = vector.broadcast %cst_37 : f32 to vector<8x128xf32>
    %124 = arith.addf %123, %122 : vector<8x128xf32>
    %125 = arith.divf %123, %124 : vector<8x128xf32>
    %126 = math.tanh %120 : vector<8x128xf32>
    %c96_i32_38 = arith.constant 96 : i32
    %127 = tpu.dynamic_rotate %125 by %c96_i32_38 dim 1 : vector<8x128xf32>, i32 -> vector<8x128xf32>
    %c64_i32_39 = arith.constant 64 : i32
    %128 = tpu.dynamic_rotate %126 by %c64_i32_39 dim 1 : vector<8x128xf32>, i32 -> vector<8x128xf32>
    %c32_i32_40 = arith.constant 32 : i32
    %129 = tpu.dynamic_rotate %125 by %c32_i32_40 dim 1 : vector<8x128xf32>, i32 -> vector<8x128xf32>
    %130 = arith.mulf %127, %114 : vector<8x128xf32>
    %131 = arith.mulf %125, %128 : vector<8x128xf32>
    %132 = arith.addf %130, %131 : vector<8x128xf32>
    %133 = math.tanh %132 : vector<8x128xf32>
    %134 = arith.mulf %129, %133 : vector<8x128xf32>
    %135 = vector.extract_strided_slice %5 {offsets = [56, 0], sizes = [8, 128], strides = [1, 1]} : vector<64x128xf32> to vector<8x128xf32>
    %136 = arith.truncf %134 : vector<8x128xf32> to vector<8x128xbf16>
    %cst_41 = arith.constant dense<0.000000e+00> : vector<8x128xf32>
    %137 = tpu.matmul %136, %6, %cst_41 {dimension_numbers = #tpu.dot_dimension_numbers<[1], [0], [0], [1], [0, 0, 1, 1], [], []>} : vector<8x128xbf16>, vector<128x128xbf16>, vector<8x128xf32> -> vector<8x128xf32>
    %138 = arith.addf %135, %137 : vector<8x128xf32>
    %139 = arith.negf %138 : vector<8x128xf32>
    %140 = math.exp %139 : vector<8x128xf32>
    %cst_42 = arith.constant 1.000000e+00 : f32
    %141 = vector.broadcast %cst_42 : f32 to vector<8x128xf32>
    %142 = arith.addf %141, %140 : vector<8x128xf32>
    %143 = arith.divf %141, %142 : vector<8x128xf32>
    %144 = math.tanh %138 : vector<8x128xf32>
    %c96_i32_43 = arith.constant 96 : i32
    %145 = tpu.dynamic_rotate %143 by %c96_i32_43 dim 1 : vector<8x128xf32>, i32 -> vector<8x128xf32>
    %c64_i32_44 = arith.constant 64 : i32
    %146 = tpu.dynamic_rotate %144 by %c64_i32_44 dim 1 : vector<8x128xf32>, i32 -> vector<8x128xf32>
    %c32_i32_45 = arith.constant 32 : i32
    %147 = tpu.dynamic_rotate %143 by %c32_i32_45 dim 1 : vector<8x128xf32>, i32 -> vector<8x128xf32>
    %148 = arith.mulf %145, %132 : vector<8x128xf32>
    %149 = arith.mulf %143, %146 : vector<8x128xf32>
    %150 = arith.addf %148, %149 : vector<8x128xf32>
    %151 = math.tanh %150 : vector<8x128xf32>
    %152 = arith.mulf %147, %151 : vector<8x128xf32>
    %c0_46 = arith.constant 0 : index
    %c0_47 = arith.constant 0 : index
    %153 = vector.load %arg4[%c0_46, %c0_47] : memref<1x128xf32, #tpu.memory_space<vmem>>, vector<1x128xf32>
    %154 = vector.broadcast %153 : vector<1x128xf32> to vector<8x128xf32>
    %155 = arith.mulf %152, %154 : vector<8x128xf32>
    %cst_48 = arith.constant dense<0.000000e+00> : vector<8xf32>
    %156 = vector.multi_reduction <add>, %155, %cst_48 [1] : vector<8x128xf32> to vector<8xf32>
    %157 = vector.shape_cast %156 : vector<8xf32> to vector<8x1xf32>
    %c0_49 = arith.constant 0 : index
    %c0_50 = arith.constant 0 : index
    %158 = vector.load %arg5[%c0_49, %c0_50] : memref<1x1xf32, #tpu.memory_space<vmem>>, vector<1x1xf32>
    %159 = vector.broadcast %158 : vector<1x1xf32> to vector<8x1xf32>
    %160 = arith.addf %157, %159 : vector<8x1xf32>
    %161 = arith.negf %160 : vector<8x1xf32>
    %162 = math.exp %161 : vector<8x1xf32>
    %cst_51 = arith.constant 1.000000e+00 : f32
    %163 = vector.broadcast %cst_51 : f32 to vector<8x1xf32>
    %164 = arith.addf %163, %162 : vector<8x1xf32>
    %165 = arith.divf %163, %164 : vector<8x1xf32>
    %c0_52 = arith.constant 0 : index
    %c0_53 = arith.constant 0 : index
    %166 = vector.load %arg6[%c0_52, %c0_53] : memref<8x1xf32, #tpu.memory_space<vmem>>, vector<8x1xf32>
    tpu.vector_store %arg6[%c0_52, %c0_53], %165 {strides = array<i32>} : memref<8x1xf32, #tpu.memory_space<vmem>>, vector<8x1xf32>,
    return
  }
}

</mosaic_0001>

<llo_original>
// kernel: reward_max_margin_forward.1
$region0: #{reward_max_margin_forward.1}
  #allocation0 [shape = 'u32[]', space=smem, size = 0x4, offset = 0x4, fixed_abs, tag = 'smem constant byte address 0x4 - core index']
  #allocation1 [shape = 'u32[72,128]{1,0:T(1,128)}', space=vmem, size = 0x9000, scoped, tag = 'internal scratch']
  #allocation2 [shape = 'f32[1,1]{1,0:T(1,128)S(1)}', space=vmem, size = 0x200, scoped, tag = 'scoped memory for reward_max_margin_forward.1']
  %s0 = inlined_call_operand.vmem [shape: bf16[64,32], index: 0, kind: input, shape index: {}]
  %s1 = inlined_call_operand.vmem [shape: bf16[32,128], index: 1, kind: input, shape index: {}]
  %s2 = inlined_call_operand.vmem [shape: f32[1,128], index: 2, kind: input, shape index: {}]
  %s3 = inlined_call_operand.vmem [shape: bf16[128,128], index: 3, kind: input, shape index: {}]
  %s4 = inlined_call_operand.vmem [shape: f32[1,128], index: 4, kind: input, shape index: {}]
  %s5 = inlined_call_operand.<no memory space> [shape: f32[1,1], index: 5, kind: input, shape index: {}]
  %s6 = inlined_call_operand.vmem [shape: f32[8,1], index: 6, kind: output, shape index: {}]
  %s7 = sld [smem:[#allocation0]]
  $region34: #{reward_max_margin_forward.1} parent=0
    _
  %s9 = ssub.s32 1, %s7
  %s10 = scalar_select 0, %s9, %s7
  %v11 = vstv %s5
  %12 = vst [vmem:[#allocation2] sm:$0x1] %v11
  // Predicated region
  $region2: #{reward_max_margin_forward.1} parent=0 // pred_check
    _
  $region3: #{reward_max_margin_forward.1} parent=0 // pred_check_branch
    %14 = sbr.rel (0) target = $region5
  $region4: #{reward_max_margin_forward.1} parent=0 // pred_region
    _
  $region5: #{reward_max_margin_forward.1} parent=0 // pred_fallthru
    _
  // Predicated region
  $region6: #{reward_max_margin_forward.1} parent=0 // pred_check
    _
  $region7: #{reward_max_margin_forward.1} parent=0 // pred_check_branch
    %16 = sbr.rel (0) target = $region9
  $region8: #{reward_max_margin_forward.1} parent=0 // pred_region
    _
  $region9: #{reward_max_margin_forward.1} parent=0 // pred_fallthru
    _
  // Predicated region
  $region10: #{reward_max_margin_forward.1} parent=0 // pred_check
    _
  $region11: #{reward_max_margin_forward.1} parent=0 // pred_check_branch
    %18 = sbr.rel (0) target = $region13
  $region12: #{reward_max_margin_forward.1} parent=0 // pred_region
    _
  $region13: #{reward_max_margin_forward.1} parent=0 // pred_fallthru
    _
  // Predicated region
  $region14: #{reward_max_margin_forward.1} parent=0 // pred_check
    _
  $region15: #{reward_max_margin_forward.1} parent=0 // pred_check_branch
    %20 = sbr.rel (0) target = $region17
  $region16: #{reward_max_margin_forward.1} parent=0 // pred_region
    _
  $region17: #{reward_max_margin_forward.1} parent=0 // pred_fallthru
    _
  // Predicated region
  $region18: #{reward_max_margin_forward.1} parent=0 // pred_check
    _
  $region19: #{reward_max_margin_forward.1} parent=0 // pred_check_branch
    %22 = sbr.rel (0) target = $region21
  $region20: #{reward_max_margin_forward.1} parent=0 // pred_region
    _
  $region21: #{reward_max_margin_forward.1} parent=0 // pred_fallthru
    _
  // Predicated region
  $region22: #{reward_max_margin_forward.1} parent=0 // pred_check
    _
  $region23: #{reward_max_margin_forward.1} parent=0 // pred_check_branch
    %24 = sbr.rel (0) target = $region25
  $region24: #{reward_max_margin_forward.1} parent=0 // pred_region
    _
  $region25: #{reward_max_margin_forward.1} parent=0 // pred_fallthru
    _
  %v26 = vld [vmem:[%s0] sm:$0xf]
  %v27 = vld [vmem:[%s0 + $0x4] sm:$0xf]
  %v28 = vld [vmem:[%s0 + $0x8] sm:$0xf]
  %v29 = vld [vmem:[%s0 + $0xc] sm:$0xf]
  %v30 = vld [vmem:[%s0 + $0x10] sm:$0xf]
  %v31 = vld [vmem:[%s0 + $0x14] sm:$0xf]
  %v32 = vld [vmem:[%s0 + $0x18] sm:$0xf]
  %v33 = vld [vmem:[%s0 + $0x1c] sm:$0xf]
  %v34 = vld [vmem:[%s1] sm:$0xf]
  %v35 = vld [vmem:[%s1 + $0x4] sm:$0xf]
  %v36 = vld [vmem:[%s1 + $0x8] sm:$0xf]
  %v37 = vld [vmem:[%s1 + $0xc] sm:$0xf]
  %v38 = vld [vmem:[%s2] sm:$0x1]
  %v40 = vperm.slane %v38, 0
  %v50 = vunpack.c.l.b16 %v26
  %v51 = vunpack.c.l.b16 %v27
  %v52 = vunpack.c.l.b16 %v28
  %v53 = vunpack.c.l.b16 %v29
  %v54 = vunpack.c.l.b16 %v30
  %v55 = vunpack.c.l.b16 %v31
  %v56 = vunpack.c.l.b16 %v32
  %v57 = vunpack.c.l.b16 %v33
  %v58 = vpack.c.b16 %v51, %v50
  %v59 = vpack.c.b16 %v53, %v52
  %v60 = vpack.c.b16 %v55, %v54
  %v61 = vpack.c.b16 %v57, %v56
  %v66 = vunpack.c.l.b16 %v34
  %v67 = vunpack.c.l.b16 %v35
  %v68 = vunpack.c.l.b16 %v36
  %v69 = vunpack.c.l.b16 %v37
  %v70 = vpack.c.b16 %v67, %v66
  %v71 = vpack.c.b16 %v69, %v68
  %vm74 = vcmask 261120
  %v76 = vsel %vm74, %v58, 0
  %v79 = vsel %vm74, %v59, 0
  %v82 = vsel %vm74, %v60, 0
  %v85 = vsel %vm74, %v61, 0
  %87 = vmatpush.bf16.msra.mxu0 0
  %88 = vmatpush.bf16.msra.mxu0 0
  %89 = vmatpush.bf16.msra.mxu0 0
  %90 = vmatpush.bf16.msra.mxu0 0
  %91 = vmatpush.bf16.msra.mxu0 0
  %92 = vmatpush.bf16.msra.mxu0 0
  %93 = vmatpush.bf16.msra.mxu0 %v71
  %94 = vmatpush.bf16.msra.mxu0 %v70
  %95 = vmatmul.bf16.gmra.mxu0 %v76
  %v96 = vpop.f32.mrf.mxu0
  %v97 = vadd.f32 %v40, %v96
  %v98 = vpop.f32.mrf.mxu0
  %v99 = vadd.f32 %v40, %v98
  %100 = vmatmul.bf16.gmra.mxu0 %v79
  %v101 = vpop.f32.mrf.mxu0
  %v102 = vadd.f32 %v40, %v101
  %v103 = vpop.f32.mrf.mxu0
  %v104 = vadd.f32 %v40, %v103
  %105 = vmatmul.bf16.gmra.mxu0 %v82
  %v106 = vpop.f32.mrf.mxu0
  %v107 = vadd.f32 %v40, %v106
  %v108 = vpop.f32.mrf.mxu0
  %v109 = vadd.f32 %v40, %v108
  %110 = vmatmul.bf16.gmra.mxu0 %v85
  %v111 = vpop.f32.mrf.mxu0
  %v112 = vadd.f32 %v40, %v111
  %v113 = vpop.f32.mrf.mxu0
  %v114 = vadd.f32 %v40, %v113
  %115 = vdwg.mxu0
  %v116 = vld [vmem:[%s3] sm:$0xf]
  %v117 = vld [vmem:[%s3 + $0x4] sm:$0xf]
  %v118 = vld [vmem:[%s3 + $0x8] sm:$0xf]
  %v119 = vld [vmem:[%s3 + $0xc] sm:$0xf]
  %v120 = vld [vmem:[%s3 + $0x10] sm:$0xf]
  %v121 = vld [vmem:[%s3 + $0x14] sm:$0xf]
  %v122 = vld [vmem:[%s3 + $0x18] sm:$0xf]
  %v123 = vld [vmem:[%s3 + $0x1c] sm:$0xf]
  %v124 = vld [vmem:[%s3 + $0x20] sm:$0xf]
  %v125 = vld [vmem:[%s3 + $0x24] sm:$0xf]
  %v126 = vld [vmem:[%s3 + $0x28] sm:$0xf]
  %v127 = vld [vmem:[%s3 + $0x2c] sm:$0xf]
  %v128 = vld [vmem:[%s3 + $0x30] sm:$0xf]
  %v129 = vld [vmem:[%s3 + $0x34] sm:$0xf]
  %v130 = vld [vmem:[%s3 + $0x38] sm:$0xf]
  %v131 = vld [vmem:[%s3 + $0x3c] sm:$0xf]
  %v148 = vunpack.c.l.b16 %v116
  %v149 = vunpack.c.l.b16 %v117
  %v150 = vunpack.c.l.b16 %v118
  %v151 = vunpack.c.l.b16 %v119
  %v152 = vunpack.c.l.b16 %v120
  %v153 = vunpack.c.l.b16 %v121
  %v154 = vunpack.c.l.b16 %v122
  %v155 = vunpack.c.l.b16 %v123
  %v156 = vunpack.c.l.b16 %v124
  %v157 = vunpack.c.l.b16 %v125
  %v158 = vunpack.c.l.b16 %v126
  %v159 = vunpack.c.l.b16 %v127
  %v160 = vunpack.c.l.b16 %v128
  %v161 = vunpack.c.l.b16 %v129
  %v162 = vunpack.c.l.b16 %v130
  %v163 = vunpack.c.l.b16 %v131
  %v164 = vpack.c.b16 %v149, %v148
  %v165 = vpack.c.b16 %v151, %v150
  %v166 = vpack.c.b16 %v153, %v152
  %v167 = vpack.c.b16 %v155, %v154
  %v168 = vpack.c.b16 %v157, %v156
  %v169 = vpack.c.b16 %v159, %v158
  %v170 = vpack.c.b16 %v161, %v160
  %v171 = vpack.c.b16 %v163, %v162
  %180 = vmatpush.bf16.msra.mxu0 %v171
  %181 = vmatpush.bf16.msra.mxu0 %v170
  %182 = vmatpush.bf16.msra.mxu0 %v169
  %183 = vmatpush.bf16.msra.mxu0 %v168
  %184 = vmatpush.bf16.msra.mxu0 %v167
  %185 = vmatpush.bf16.msra.mxu0 %v166
  %186 = vmatpush.bf16.msra.mxu0 %v165
  %187 = vmatpush.bf16.msra.mxu0 %v164
  %188 = vmatmul.bf16.gmra.mxu0 0
  %v189 = vpop.f32.mrf.mxu0
  %v190 = vadd.f32 0.0, %v189
  %v191 = vpop.f32.mrf.mxu0
  %192 = vdwg.mxu0
  %v193 = vadd.f32 %v97, %v190
  %v194 = vxor.u32 %v193, 2147483648
  %v195 = vmul.f32 %v194, 1.442695
  %v196 = vpow.pop %v195
  %v197 = vadd.f32 %v196, 1.0
  %v198 = vrcp.pop %v197
  %v199 = vmul.f32 %v197, %v198
  %v200 = vsub.f32 1.0, %v199
  %v201 = vmul.f32 %v198, %v200
  %v202 = vadd.f32 %v198, %v201
  %vm203 = vweird.f32 %v197
  %vm204 = vweird.f32 %v198
  %vm205 = vmor %vm203, %vm204
  %v206 = vsel %vm205, %v198, %v202
  %v207 = vand.u32 2147483647, %v197
  %vm208 = vcmp.eq.f32.partialorder %v207, 8.507059e+37
  %v209 = vand.u32 %v197, 2147483648
  %v210 = vor.u32 1.1754944e-38, %v209
  %v211 = vsel %vm208, %v210, %v206
  %v212 = vmul.f32 1.0, %v211
  %v213 = vtanh.pop %v193
  %214 = vrot.lane.b32.xlu0 %v212, 96
  %v215 = vpop.permute.xlu0 %214
  %216 = vrot.lane.b32.xlu0 %v213, 64
  %v217 = vpop.permute.xlu0 %216
  %218 = vrot.lane.b32.xlu0 %v212, 32
  %v219 = vpop.permute.xlu0 %218
  %v220 = vmul.f32 %v215, 0.0
  %v221 = vmul.f32 %v212, %v217
  %v222 = vadd.f32 %v220, %v221
  %v223 = vtanh.pop %v222
  %v224 = vmul.f32 %v219, %v223
  %v225 = vpack.c.bf16 %v224, %v224
  %226 = vmatpush.bf16.msra.mxu0 %v171
  %227 = vmatpush.bf16.msra.mxu0 %v170
  %228 = vmatpush.bf16.msra.mxu0 %v169
  %229 = vmatpush.bf16.msra.mxu0 %v168
  %230 = vmatpush.bf16.msra.mxu0 %v167
  %231 = vmatpush.bf16.msra.mxu0 %v166
  %232 = vmatpush.bf16.msra.mxu0 %v165
  %233 = vmatpush.bf16.msra.mxu0 %v164
  %234 = vmatmul.bf16.gmra.mxu0 %v225
  %v235 = vpop.f32.mrf.mxu0
  %v236 = vadd.f32 0.0, %v235
  %v237 = vpop.f32.mrf.mxu0
  %238 = vdwg.mxu0
  %v239 = vadd.f32 %v99, %v236
  %v240 = vxor.u32 %v239, 2147483648
  %v241 = vmul.f32 %v240, 1.442695
  %v242 = vpow.pop %v241
  %v243 = vadd.f32 %v242, 1.0
  %v244 = vrcp.pop %v243
  %v245 = vmul.f32 %v243, %v244
  %v246 = vsub.f32 1.0, %v245
  %v247 = vmul.f32 %v244, %v246
  %v248 = vadd.f32 %v244, %v247
  %vm249 = vweird.f32 %v243
  %vm250 = vweird.f32 %v244
  %vm251 = vmor %vm249, %vm250
  %v252 = vsel %vm251, %v244, %v248
  %v253 = vand.u32 2147483647, %v243
  %vm254 = vcmp.eq.f32.partialorder %v253, 8.507059e+37
  %v255 = vand.u32 %v243, 2147483648
  %v256 = vor.u32 1.1754944e-38, %v255
  %v257 = vsel %vm254, %v256, %v252
  %v258 = vmul.f32 1.0, %v257
  %v259 = vtanh.pop %v239
  %260 = vrot.lane.b32.xlu0 %v258, 96
  %v261 = vpop.permute.xlu0 %260
  %262 = vrot.lane.b32.xlu0 %v259, 64
  %v263 = vpop.permute.xlu0 %262
  %264 = vrot.lane.b32.xlu0 %v258, 32
  %v265 = vpop.permute.xlu0 %264
  %v266 = vmul.f32 %v261, %v222
  %v267 = vmul.f32 %v258, %v263
  %v268 = vadd.f32 %v266, %v267
  %v269 = vtanh.pop %v268
  %v270 = vmul.f32 %v265, %v269
  %v271 = vpack.c.bf16 %v270, %v270
  %272 = vmatpush.bf16.msra.mxu0 %v171
  %273 = vmatpush.bf16.msra.mxu0 %v170
  %274 = vmatpush.bf16.msra.mxu0 %v169
  %275 = vmatpush.bf16.msra.mxu0 %v168
  %276 = vmatpush.bf16.msra.mxu0 %v167
  %277 = vmatpush.bf16.msra.mxu0 %v166
  %278 = vmatpush.bf16.msra.mxu0 %v165
  %279 = vmatpush.bf16.msra.mxu0 %v164
  %280 = vmatmul.bf16.gmra.mxu0 %v271
  %v281 = vpop.f32.mrf.mxu0
  %v282 = vadd.f32 0.0, %v281
  %v283 = vpop.f32.mrf.mxu0
  %284 = vdwg.mxu0
  %v285 = vadd.f32 %v102, %v282
  %v286 = vxor.u32 %v285, 2147483648
  %v287 = vmul.f32 %v286, 1.442695
  %v288 = vpow.pop %v287
  %v289 = vadd.f32 %v288, 1.0
  %v290 = vrcp.pop %v289
  %v291 = vmul.f32 %v289, %v290
  %v292 = vsub.f32 1.0, %v291
  %v293 = vmul.f32 %v290, %v292
  %v294 = vadd.f32 %v290, %v293
  %vm295 = vweird.f32 %v289
  %vm296 = vweird.f32 %v290
  %vm297 = vmor %vm295, %vm296
  %v298 = vsel %vm297, %v290, %v294
  %v299 = vand.u32 2147483647, %v289
  %vm300 = vcmp.eq.f32.partialorder %v299, 8.507059e+37
  %v301 = vand.u32 %v289, 2147483648
  %v302 = vor.u32 1.1754944e-38, %v301
  %v303 = vsel %vm300, %v302, %v298
  %v304 = vmul.f32 1.0, %v303
  %v305 = vtanh.pop %v285
  %306 = vrot.lane.b32.xlu0 %v304, 96
  %v307 = vpop.permute.xlu0 %306
  %308 = vrot.lane.b32.xlu0 %v305, 64
  %v309 = vpop.permute.xlu0 %308
  %310 = vrot.lane.b32.xlu0 %v304, 32
  %v311 = vpop.permute.xlu0 %310
  %v312 = vmul.f32 %v307, %v268
  %v313 = vmul.f32 %v304, %v309
  %v314 = vadd.f32 %v312, %v313
  %v315 = vtanh.pop %v314
  %v316 = vmul.f32 %v311, %v315
  %v317 = vpack.c.bf16 %v316, %v316
  %318 = vmatpush.bf16.msra.mxu0 %v171
  %319 = vmatpush.bf16.msra.mxu0 %v170
  %320 = vmatpush.bf16.msra.mxu0 %v169
  %321 = vmatpush.bf16.msra.mxu0 %v168
  %322 = vmatpush.bf16.msra.mxu0 %v167
  %323 = vmatpush.bf16.msra.mxu0 %v166
  %324 = vmatpush.bf16.msra.mxu0 %v165
  %325 = vmatpush.bf16.msra.mxu0 %v164
  %326 = vmatmul.bf16.gmra.mxu0 %v317
  %v327 = vpop.f32.mrf.mxu0
  %v328 = vadd.f32 0.0, %v327
  %v329 = vpop.f32.mrf.mxu0
  %330 = vdwg.mxu0
  %v331 = vadd.f32 %v104, %v328
  %v332 = vxor.u32 %v331, 2147483648
  %v333 = vmul.f32 %v332, 1.442695
  %v334 = vpow.pop %v333
  %v335 = vadd.f32 %v334, 1.0
  %v336 = vrcp.pop %v335
  %v337 = vmul.f32 %v335, %v336
  %v338 = vsub.f32 1.0, %v337
  %v339 = vmul.f32 %v336, %v338
  %v340 = vadd.f32 %v336, %v339
  %vm341 = vweird.f32 %v335
  %vm342 = vweird.f32 %v336
  %vm343 = vmor %vm341, %vm342
  %v344 = vsel %vm343, %v336, %v340
  %v345 = vand.u32 2147483647, %v335
  %vm346 = vcmp.eq.f32.partialorder %v345, 8.507059e+37
  %v347 = vand.u32 %v335, 2147483648
  %v348 = vor.u32 1.1754944e-38, %v347
  %v349 = vsel %vm346, %v348, %v344
  %v350 = vmul.f32 1.0, %v349
  %v351 = vtanh.pop %v331
  %352 = vrot.lane.b32.xlu0 %v350, 96
  %v353 = vpop.permute.xlu0 %352
  %354 = vrot.lane.b32.xlu0 %v351, 64
  %v355 = vpop.permute.xlu0 %354
  %356 = vrot.lane.b32.xlu0 %v350, 32
  %v357 = vpop.permute.xlu0 %356
  %v358 = vmul.f32 %v353, %v314
  %v359 = vmul.f32 %v350, %v355
  %v360 = vadd.f32 %v358, %v359
  %v361 = vtanh.pop %v360
  %v362 = vmul.f32 %v357, %v361
  %v363 = vpack.c.bf16 %v362, %v362
  %364 = vmatpush.bf16.msra.mxu0 %v171
  %365 = vmatpush.bf16.msra.mxu0 %v170
  %366 = vmatpush.bf16.msra.mxu0 %v169
  %367 = vmatpush.bf16.msra.mxu0 %v168
  %368 = vmatpush.bf16.msra.mxu0 %v167
  %369 = vmatpush.bf16.msra.mxu0 %v166
  %370 = vmatpush.bf16.msra.mxu0 %v165
  %371 = vmatpush.bf16.msra.mxu0 %v164
  %372 = vmatmul.bf16.gmra.mxu0 %v363
  %v373 = vpop.f32.mrf.mxu0
  %v374 = vadd.f32 0.0, %v373
  %v375 = vpop.f32.mrf.mxu0
  %376 = vdwg.mxu0
  %v377 = vadd.f32 %v107, %v374
  %v378 = vxor.u32 %v377, 2147483648
  %v379 = vmul.f32 %v378, 1.442695
  %v380 = vpow.pop %v379
  %v381 = vadd.f32 %v380, 1.0
  %v382 = vrcp.pop %v381
  %v383 = vmul.f32 %v381, %v382
  %v384 = vsub.f32 1.0, %v383
  %v385 = vmul.f32 %v382, %v384
  %v386 = vadd.f32 %v382, %v385
  %vm387 = vweird.f32 %v381
  %vm388 = vweird.f32 %v382
  %vm389 = vmor %vm387, %vm388
  %v390 = vsel %vm389, %v382, %v386
  %v391 = vand.u32 2147483647, %v381
  %vm392 = vcmp.eq.f32.partialorder %v391, 8.507059e+37
  %v393 = vand.u32 %v381, 2147483648
  %v394 = vor.u32 1.1754944e-38, %v393
  %v395 = vsel %vm392, %v394, %v390
  %v396 = vmul.f32 1.0, %v395
  %v397 = vtanh.pop %v377
  %398 = vrot.lane.b32.xlu0 %v396, 96
  %v399 = vpop.permute.xlu0 %398
  %400 = vrot.lane.b32.xlu0 %v397, 64
  %v401 = vpop.permute.xlu0 %400
  %402 = vrot.lane.b32.xlu0 %v396, 32
  %v403 = vpop.permute.xlu0 %402
  %v404 = vmul.f32 %v399, %v360
  %v405 = vmul.f32 %v396, %v401
  %v406 = vadd.f32 %v404, %v405
  %v407 = vtanh.pop %v406
  %v408 = vmul.f32 %v403, %v407
  %v409 = vpack.c.bf16 %v408, %v408
  %410 = vmatpush.bf16.msra.mxu0 %v171
  %411 = vmatpush.bf16.msra.mxu0 %v170
  %412 = vmatpush.bf16.msra.mxu0 %v169
  %413 = vmatpush.bf16.msra.mxu0 %v168
  %414 = vmatpush.bf16.msra.mxu0 %v167
  %415 = vmatpush.bf16.msra.mxu0 %v166
  %416 = vmatpush.bf16.msra.mxu0 %v165
  %417 = vmatpush.bf16.msra.mxu0 %v164
  %418 = vmatmul.bf16.gmra.mxu0 %v409
  %v419 = vpop.f32.mrf.mxu0
  %v420 = vadd.f32 0.0, %v419
  %v421 = vpop.f32.mrf.mxu0
  %422 = vdwg.mxu0
  %v423 = vadd.f32 %v109, %v420
  %v424 = vxor.u32 %v423, 2147483648
  %v425 = vmul.f32 %v424, 1.442695
  %v426 = vpow.pop %v425
  %v427 = vadd.f32 %v426, 1.0
  %v428 = vrcp.pop %v427
  %v429 = vmul.f32 %v427, %v428
  %v430 = vsub.f32 1.0, %v429
  %v431 = vmul.f32 %v428, %v430
  %v432 = vadd.f32 %v428, %v431
  %vm433 = vweird.f32 %v427
  %vm434 = vweird.f32 %v428
  %vm435 = vmor %vm433, %vm434
  %v436 = vsel %vm435, %v428, %v432
  %v437 = vand.u32 2147483647, %v427
  %vm438 = vcmp.eq.f32.partialorder %v437, 8.507059e+37
  %v439 = vand.u32 %v427, 2147483648
  %v440 = vor.u32 1.1754944e-38, %v439
  %v441 = vsel %vm438, %v440, %v436
  %v442 = vmul.f32 1.0, %v441
  %v443 = vtanh.pop %v423
  %444 = vrot.lane.b32.xlu0 %v442, 96
  %v445 = vpop.permute.xlu0 %444
  %446 = vrot.lane.b32.xlu0 %v443, 64
  %v447 = vpop.permute.xlu0 %446
  %448 = vrot.lane.b32.xlu0 %v442, 32
  %v449 = vpop.permute.xlu0 %448
  %v450 = vmul.f32 %v445, %v406
  %v451 = vmul.f32 %v442, %v447
  %v452 = vadd.f32 %v450, %v451
  %v453 = vtanh.pop %v452
  %v454 = vmul.f32 %v449, %v453
  %v455 = vpack.c.bf16 %v454, %v454
  %456 = vmatpush.bf16.msra.mxu0 %v171
  %457 = vmatpush.bf16.msra.mxu0 %v170
  %458 = vmatpush.bf16.msra.mxu0 %v169
  %459 = vmatpush.bf16.msra.mxu0 %v168
  %460 = vmatpush.bf16.msra.mxu0 %v167
  %461 = vmatpush.bf16.msra.mxu0 %v166
  %462 = vmatpush.bf16.msra.mxu0 %v165
  %463 = vmatpush.bf16.msra.mxu0 %v164
  %464 = vmatmul.bf16.gmra.mxu0 %v455
  %v465 = vpop.f32.mrf.mxu0
  %v466 = vadd.f32 0.0, %v465
  %v467 = vpop.f32.mrf.mxu0
  %468 = vdwg.mxu0
  %v469 = vadd.f32 %v112, %v466
  %v470 = vxor.u32 %v469, 2147483648
  %v471 = vmul.f32 %v470, 1.442695
  %v472 = vpow.pop %v471
  %v473 = vadd.f32 %v472, 1.0
  %v474 = vrcp.pop %v473
  %v475 = vmul.f32 %v473, %v474
  %v476 = vsub.f32 1.0, %v475
  %v477 = vmul.f32 %v474, %v476
  %v478 = vadd.f32 %v474, %v477
  %vm479 = vweird.f32 %v473
  %vm480 = vweird.f32 %v474
  %vm481 = vmor %vm479, %vm480
  %v482 = vsel %vm481, %v474, %v478
  %v483 = vand.u32 2147483647, %v473
  %vm484 = vcmp.eq.f32.partialorder %v483, 8.507059e+37
  %v485 = vand.u32 %v473, 2147483648
  %v486 = vor.u32 1.1754944e-38, %v485
  %v487 = vsel %vm484, %v486, %v482
  %v488 = vmul.f32 1.0, %v487
  %v489 = vtanh.pop %v469
  %490 = vrot.lane.b32.xlu0 %v488, 96
  %v491 = vpop.permute.xlu0 %490
  %492 = vrot.lane.b32.xlu0 %v489, 64
  %v493 = vpop.permute.xlu0 %492
  %494 = vrot.lane.b32.xlu0 %v488, 32
  %v495 = vpop.permute.xlu0 %494
  %v496 = vmul.f32 %v491, %v452
  %v497 = vmul.f32 %v488, %v493
  %v498 = vadd.f32 %v496, %v497
  %v499 = vtanh.pop %v498
  %v500 = vmul.f32 %v495, %v499
  %v501 = vpack.c.bf16 %v500, %v500
  %502 = vmatpush.bf16.msra.mxu0 %v171
  %503 = vmatpush.bf16.msra.mxu0 %v170
  %504 = vmatpush.bf16.msra.mxu0 %v169
  %505 = vmatpush.bf16.msra.mxu0 %v168
  %506 = vmatpush.bf16.msra.mxu0 %v167
  %507 = vmatpush.bf16.msra.mxu0 %v166
  %508 = vmatpush.bf16.msra.mxu0 %v165
  %509 = vmatpush.bf16.msra.mxu0 %v164
  %510 = vmatmul.bf16.gmra.mxu0 %v501
  %v511 = vpop.f32.mrf.mxu0
  %v512 = vadd.f32 0.0, %v511
  %v513 = vpop.f32.mrf.mxu0
  %514 = vdwg.mxu0
  %v515 = vadd.f32 %v114, %v512
  %v516 = vxor.u32 %v515, 2147483648
  %v517 = vmul.f32 %v516, 1.442695
  %v518 = vpow.pop %v517
  %v519 = vadd.f32 %v518, 1.0
  %v520 = vrcp.pop %v519
  %v521 = vmul.f32 %v519, %v520
  %v522 = vsub.f32 1.0, %v521
  %v523 = vmul.f32 %v520, %v522
  %v524 = vadd.f32 %v520, %v523
  %vm525 = vweird.f32 %v519
  %vm526 = vweird.f32 %v520
  %vm527 = vmor %vm525, %vm526
  %v528 = vsel %vm527, %v520, %v524
  %v529 = vand.u32 2147483647, %v519
  %vm530 = vcmp.eq.f32.partialorder %v529, 8.507059e+37
  %v531 = vand.u32 %v519, 2147483648
  %v532 = vor.u32 1.1754944e-38, %v531
  %v533 = vsel %vm530, %v532, %v528
  %v534 = vmul.f32 1.0, %v533
  %v535 = vtanh.pop %v515
  %536 = vrot.lane.b32.xlu0 %v534, 96
  %v537 = vpop.permute.xlu0 %536
  %538 = vrot.lane.b32.xlu0 %v535, 64
  %v539 = vpop.permute.xlu0 %538
  %540 = vrot.lane.b32.xlu0 %v534, 32
  %v541 = vpop.permute.xlu0 %540
  %v542 = vmul.f32 %v537, %v498
  %v543 = vmul.f32 %v534, %v539
  %v544 = vadd.f32 %v542, %v543
  %v545 = vtanh.pop %v544
  %v546 = vmul.f32 %v541, %v545
  %v547 = vld [vmem:[%s4] sm:$0x1]
  %v549 = vperm.slane %v547, 0
  %v551 = vmul.f32 %v546, %v549
  %552 = vadd.xlane.f32.xlu0 %v551
  %v553 = vpop.xlane.xlu0 %552
  %v554 = vld [vmem:[#allocation2] sm:$0x1]
  %v556 = vperm.slane %v554, 0
  %v558 = vadd.f32 %v553, %v556
  %v559 = vxor.u32 %v558, 2147483648
  %v560 = vmul.f32 %v559, 1.442695
  %v561 = vpow.pop %v560
  %v562 = vadd.f32 %v561, 1.0
  %v563 = vrcp.pop %v562
  %v564 = vmul.f32 %v562, %v563
  %v565 = vsub.f32 1.0, %v564
  %v566 = vmul.f32 %v563, %v565
  %v567 = vadd.f32 %v563, %v566
  %vm568 = vweird.f32 %v562
  %vm569 = vweird.f32 %v563
  %vm570 = vmor %vm568, %vm569
  %v571 = vsel %vm570, %v563, %v567
  %v572 = vand.u32 2147483647, %v562
  %vm573 = vcmp.eq.f32.partialorder %v572, 8.507059e+37
  %v574 = vand.u32 %v562, 2147483648
  %v575 = vor.u32 1.1754944e-38, %v574
  %v576 = vsel %vm573, %v575, %v571
  %v577 = vmul.f32 1.0, %v576
  %vm578 = vcmask 7168
  %579 = vst.msk [vmem:[%s6] sm:$0xff] %vm578, %v577
  // Predicated region
  $region26: #{reward_max_margin_forward.1} parent=0 // pred_check
    _
  $region27: #{reward_max_margin_forward.1} parent=0 // pred_check_branch
    %581 = sbr.rel (0) target = $region29
  $region28: #{reward_max_margin_forward.1} parent=0 // pred_region
    _
  $region29: #{reward_max_margin_forward.1} parent=0 // pred_fallthru
    _
  // Predicated region
  $region30: #{reward_max_margin_forward.1} parent=0 // pred_check
    _
  $region31: #{reward_max_margin_forward.1} parent=0 // pred_check_branch
    %583 = sbr.rel (0) target = $region33
  $region32: #{reward_max_margin_forward.1} parent=0 // pred_region
    _
  $region33: #{reward_max_margin_forward.1} parent=0 // pred_fallthru
    _

</llo_original>
